<compile_context>
chip_gen: v7x
topology: tpu7x:2x2x1
jax: 0.10.0
libtpu: 0.0.40
codegen_flags: <defaults>
</compile_context>

<pallas_src>
import functools

import jax
import jax.numpy as jnp
from jax.experimental import pallas as pl
from jax.experimental.pallas import tpu as pltpu

_LANE = 128
_DEFAULT_VMEM_BYTES = 64 * 1024 * 1024  # conservative default (v7x per-core VMEM)


def _round_up(x: int, n: int) -> int:
    return (x + n - 1) // n * n


def _vmem_capacity_bytes() -> int:
    try:
        return int(pltpu.get_tpu_info().vmem_capacity_bytes)
    except Exception:
        return _DEFAULT_VMEM_BYTES


def _tpu_generation() -> str:
    try:
        kind = jax.devices()[0].device_kind.lower()
    except Exception:
        return "unknown"
    for tag in ("v7", "v6", "v5"):
        if tag in kind:
            return tag
    return "unknown"


def _lora_matmul_kernel(x_ref, w_ref, o_ref, *, precision):
    # One MXU matmul per (TM, hidden) row tile; f32 accumulation, single store epilogue.
    o_ref[...] = jnp.dot(
        x_ref[...],
        w_ref[...],
        preferred_element_type=jnp.float32,
        precision=precision,
    ).astype(o_ref.dtype)


def lora_forward(hidden_states: jax.Array, lora_weights: jax.Array) -> jax.Array:
    """Pallas implementation of LoRAModule.forward: hidden_states @ lora_weights."""
    *lead, hidden = hidden_states.shape
    hidden_w, rank = lora_weights.shape
    assert hidden == hidden_w, "hidden_size mismatch"

    m = 1
    for d in lead:
        m *= d
    x2d = hidden_states.reshape(m, hidden)

    out_dtype = hidden_states.dtype
    x_bytes = jnp.dtype(hidden_states.dtype).itemsize
    w_bytes = jnp.dtype(lora_weights.dtype).itemsize
    o_bytes = jnp.dtype(out_dtype).itemsize

    # Lane-dense output: pad rank up to a multiple of 128 so stores are full-width
    # vst.  Deliberately 128, not 256 (memory-bound; see header comment).
    rank_p = _round_up(rank, _LANE)
    w_padded = lora_weights
    if rank_p != rank:
        w_padded = jnp.pad(lora_weights, ((0, 0), (0, rank_p - rank)))

    # ---- Generation-aware row-tile sizing ---------------------------------
    gen = _tpu_generation()
    if gen == "v5":
        tm_gen_cap, min_grid, tm_floor = 2048, 1, 2048   # single TC, big tiles
    elif gen == "v6":
        tm_gen_cap, min_grid, tm_floor = 1024, 2, 512    # roofline flat past ~1024
    else:  # v7x or unknown: 2 TCs, 64 MiB/TC -> keep grid occupied
        tm_gen_cap, min_grid, tm_floor = 1024, 8, 512

    vmem_cap = _vmem_capacity_bytes()
    # Budget: 2 x-buffers + 2 out-buffers per row, PLUS the (double-buffered)
    # resident weight slab, with headroom for compiler scratch.
    w_slab = 2 * hidden * rank_p * w_bytes
    budget = max(int(vmem_cap * 0.6) - w_slab, _LANE * (2 * hidden * x_bytes))
    per_row = 2 * hidden * x_bytes + 2 * rank_p * o_bytes
    tm_vmem = max(_LANE, (budget // max(per_row, 1)) // _LANE * _LANE)

    tm = min(tm_gen_cap, tm_vmem)
    if min_grid > 1:
        # Grid-occupancy floor: aim for >= min_grid steps (pipelining + dual-TC),
        # but never shrink tiles below tm_floor rows.
        tm_for_grid = _round_up(pl.cdiv(m, min_grid), _LANE)
        tm = min(tm, max(tm_floor, tm_for_grid))
    tm = max(_LANE, min(tm, _round_up(m, _LANE)))  # never exceed the problem size

    # Ragged last block is handled by Pallas (no jnp.pad copy of the activations).
    grid_m = pl.cdiv(m, tm)

    # Exact f32 accumulation to match torch f32 matmul; native path for bf16.
    precision = (
        jax.lax.Precision.HIGHEST if hidden_states.dtype == jnp.float32 else None
    )

    cost = pl.CostEstimate(
        flops=2 * m * hidden * rank_p,
        bytes_accessed=(
            m * hidden * x_bytes + hidden * rank_p * w_bytes + m * rank_p * o_bytes
        ),
        transcendentals=0,
    )

    out2d = pl.pallas_call(
        functools.partial(_lora_matmul_kernel, precision=precision),
        out_shape=jax.ShapeDtypeStruct((m, rank_p), out_dtype),
        grid_spec=pltpu.PrefetchScalarGridSpec(
            num_scalar_prefetch=0,
            grid=(grid_m,),
            in_specs=[
                # Row tile of activations; hidden (K) kept whole -> no reduction axis.
                pl.BlockSpec((tm, hidden), lambda i: (i, 0)),
                # Constant block index: weights stay VMEM-resident across all row tiles.
                pl.BlockSpec((hidden, rank_p), lambda i: (0, 0)),
            ],
            out_specs=pl.BlockSpec((tm, rank_p), lambda i: (i, 0)),
        ),
        compiler_params=pltpu.CompilerParams(
            # Pure row-parallel grid: shardable across both v7x TensorCores;
            # harmless no-op on single-TC v5e/v6e.
            dimension_semantics=("parallel",),
            # Raise above the default scoped limit (16/32 MiB) so large TM fits.
            vmem_limit_bytes=min(int(vmem_cap * 0.75), 96 * 1024 * 1024),
        ),
        cost_estimate=cost,
    )(x2d, w_padded)

    if rank_p != rank:
        out2d = out2d[:, :rank]
    return out2d.reshape(*lead, rank)


if __name__ == "__main__":
    # Deterministic parameter / input construction (mirrors nn.Parameter(torch.randn(...)))
    batch, seq, hidden_size, lora_rank = 2, 8, 32, 16

    key = jax.random.PRNGKey(0)
    k_x, k_w = jax.random.split(key)
    hidden_states = jax.random.normal(k_x, (batch, seq, hidden_size), dtype=jnp.float32)
    lora_weights = jax.random.normal(k_w, (hidden_size, lora_rank), dtype=jnp.float32)

    out = lora_forward(hidden_states, lora_weights)
    out = jax.block_until_ready(out)

    # Sanity check against plain-JAX reference
    ref = jnp.matmul(
        hidden_states, lora_weights, precision=jax.lax.Precision.HIGHEST
    )
    assert out.shape == (batch, seq, lora_rank)
    assert jnp.allclose(out, ref, atol=1e-5, rtol=1e-5)

    print("KERNEL_OK")
</pallas_src>

<mosaic_0001>
module attributes {stable_mosaic.version = 11 : i64} {
  func.func @_lora_matmul_kernel(%arg0: i32, %arg1: memref<128x32xf32, #tpu.memory_space<vmem>>, %arg2: memref<32x128xf32, #tpu.memory_space<vmem>>, %arg3: memref<128x128xf32, #tpu.memory_space<vmem>>) attributes {dimension_semantics = [#tpu.dimension_semantics<parallel>], iteration_bounds = array<i64: 1>, scalar_prefetch = 0 : i64, scratch_operands = 0 : i64, tpu.core_type = #tpu.core_type<tc>, window_params = [{transform_indices = @transform_0, window_bounds = array<i64: 128, 32>}, {pipeline_mode = #tpu.pipeline_mode<synchronous>, transform_indices = @transform_1, window_bounds = array<i64: 32, 128>}, {transform_indices = @transform_2, window_bounds = array<i64: 128, 128>}]} {
    %c0 = arith.constant 0 : index
    %c0_0 = arith.constant 0 : index
    %0 = vector.load %arg1[%c0, %c0_0] : memref<128x32xf32, #tpu.memory_space<vmem>>, vector<128x32xf32>
    %c0_1 = arith.constant 0 : index
    %c0_2 = arith.constant 0 : index
    %1 = vector.load %arg2[%c0_1, %c0_2] : memref<32x128xf32, #tpu.memory_space<vmem>>, vector<32x128xf32>
    %cst = arith.constant dense<0.000000e+00> : vector<128x128xf32>
    %2 = tpu.matmul %0, %1, %cst {dimension_numbers = #tpu.dot_dimension_numbers<[1], [0], [0], [1], [0, 0, 1, 1], [], []>, precision = #tpu.contract_precision<fp32>} : vector<128x32xf32>, vector<32x128xf32>, vector<128x128xf32> -> vector<128x128xf32>
    %c0_3 = arith.constant 0 : index
    %c0_4 = arith.constant 0 : index
    %3 = vector.load %arg3[%c0_3, %c0_4] : memref<128x128xf32, #tpu.memory_space<vmem>>, vector<128x128xf32>
    tpu.vector_store %arg3[%c0_3, %c0_4], %2 {strides = array<i32>} : memref<128x128xf32, #tpu.memory_space<vmem>>, vector<128x128xf32>,
    return
  }
  func.func @transform_0(%arg0: i32) -> (i32, i32) {
    %c0_i32 = arith.constant 0 : i32
    %c0_i32_0 = arith.constant 0 : i32
    return %arg0, %c0_i32 : i32, i32
  }
  func.func @transform_1(%arg0: i32) -> (i32, i32) {
    %c0_i32 = arith.constant 0 : i32
    %c0_i32_0 = arith.constant 0 : i32
    %c0_i32_1 = arith.constant 0 : i32
    return %c0_i32, %c0_i32_0 : i32, i32
  }
  func.func @transform_2(%arg0: i32) -> (i32, i32) {
    %c0_i32 = arith.constant 0 : i32
    %c0_i32_0 = arith.constant 0 : i32
    return %arg0, %c0_i32 : i32, i32
  }
}

</mosaic_0001>

<llo_original>
// kernel: tpu_custom_call.1
$region0: #{tpu_custom_call.1}
  #allocation0 [shape = 'u32[]', space=smem, size = 0x4, offset = 0x4, fixed_abs, tag = 'smem constant byte address 0x4 - core index']
  #allocation1 [shape = 'u32[144,128]{1,0:T(1,128)}', space=vmem, size = 0x12000, scoped, tag = 'internal scratch']
  %s0 = inlined_call_operand.hbm [shape: f32[16,32], index: 0, kind: input, shape index: {}]
  %s1 = inlined_call_operand.hbm [shape: f32[32,128], index: 1, kind: input, shape index: {}]
  %s2 = inlined_call_operand.hbm [shape: f32[16,128], index: 2, kind: output, shape index: {}]
  %s3 = sld [smem:[#allocation0]]
  $region26: #{tpu_custom_call.1} parent=0
    _
  %s5 = ssub.s32 1, %s3
  %s6 = scalar_select 0, %s5, %s3
  $region1: #{tpu_custom_call.1} parent=0
    #allocation2 [shape = 'u8[65536]{0}', space=vmem, size = 0x10000, scoped, tag = 'input window, operand 0, single buffered']
    #allocation3 [shape = 's32[1]{0}', space=sflag, size = 0x4, scoped, tag = 'scoped memory for tpu_custom_call.1']
    #allocation4 [shape = 's32[1]{0}', space=sflag, size = 0x4, scoped, tag = 'scoped memory for tpu_custom_call.1']
    #allocation5 [shape = 'u8[16384]{0}', space=vmem, size = 0x4000, scoped, tag = 'input window, operand 1, single buffered']
    #allocation6 [shape = 's32[1]{0}', space=sflag, size = 0x4, scoped, tag = 'scoped memory for tpu_custom_call.1']
    #allocation7 [shape = 'u8[65536]{0}', space=vmem, size = 0x10000, scoped, tag = 'output window, operand 0, single buffered']
    %7 = vsyncpa [#allocation3], 0
    %8 = vsyncpa [#allocation6], 0
    %9 = vsyncpa [#allocation4], 0
    // Predicated region
    $region2: #{tpu_custom_call.1} parent=1 // pred_check
      _
    $region3: #{tpu_custom_call.1} parent=1 // pred_check_branch
      %11 = sbr.rel (0) target = $region5
    $region4: #{tpu_custom_call.1} parent=1 // pred_region
      %s13 = ssub.s32 2048, 256
      %14 = vsyncadd [#allocation3], %s13
      %s15 = sshll.u32 [#allocation2], 4
      %s16 = int_to_ptr.vmem [resolvable:$true] %s15
      %21 = dma.hbm_to_vmem [thread:$0]  %s0, 256, %s16, [#allocation3], 128, 128, 8
    $region5: #{tpu_custom_call.1} parent=1 // pred_fallthru
      _
    // Predicated region
    $region6: #{tpu_custom_call.1} parent=1 // pred_check
      _
    $region7: #{tpu_custom_call.1} parent=1 // pred_check_branch
      %23 = sbr.rel (0) target = $region9
    $region8: #{tpu_custom_call.1} parent=1 // pred_region
      %s25 = ssub.s32 512, 512
      %26 = vsyncadd [#allocation6], %s25
      %s27 = sshll.u32 [#allocation5], 4
      %s28 = int_to_ptr.vmem [resolvable:$true] %s27
      %33 = dma.hbm_to_vmem [thread:$0]  %s1, 512, %s28, [#allocation6], 128, 128, 8
    $region9: #{tpu_custom_call.1} parent=1 // pred_fallthru
      _
    // Predicated region
    $region10: #{tpu_custom_call.1} parent=1 // pred_check
      _
    $region11: #{tpu_custom_call.1} parent=1 // pred_check_branch
      %35 = sbr.rel (0) target = $region13
    $region12: #{tpu_custom_call.1} parent=1 // pred_region
      %36 = dma.done [#allocation3], 2048
    $region13: #{tpu_custom_call.1} parent=1 // pred_fallthru
      _
    // Predicated region
    $region14: #{tpu_custom_call.1} parent=1 // pred_check
      _
    $region15: #{tpu_custom_call.1} parent=1 // pred_check_branch
      %38 = sbr.rel (0) target = $region17
    $region16: #{tpu_custom_call.1} parent=1 // pred_region
      %39 = dma.done [#allocation6], 512
    $region17: #{tpu_custom_call.1} parent=1 // pred_fallthru
      _
    %v40 = vld [vmem:[#allocation2] sm:$0xff]
    %v41 = vld [vmem:[#allocation2 + $0x8] sm:$0xff]
    %v42 = vld [vmem:[#allocation2 + $0x10] sm:$0xff]
    %v43 = vld [vmem:[#allocation2 + $0x18] sm:$0xff]
    %v44 = vld [vmem:[#allocation2 + $0x20] sm:$0xff]
    %v45 = vld [vmem:[#allocation2 + $0x28] sm:$0xff]
    %v46 = vld [vmem:[#allocation2 + $0x30] sm:$0xff]
    %v47 = vld [vmem:[#allocation2 + $0x38] sm:$0xff]
    %v48 = vld [vmem:[#allocation2 + $0x40] sm:$0xff]
    %v49 = vld [vmem:[#allocation2 + $0x48] sm:$0xff]
    %v50 = vld [vmem:[#allocation2 + $0x50] sm:$0xff]
    %v51 = vld [vmem:[#allocation2 + $0x58] sm:$0xff]
    %v52 = vld [vmem:[#allocation2 + $0x60] sm:$0xff]
    %v53 = vld [vmem:[#allocation2 + $0x68] sm:$0xff]
    %v54 = vld [vmem:[#allocation2 + $0x70] sm:$0xff]
    %v55 = vld [vmem:[#allocation2 + $0x78] sm:$0xff]
    %v56 = vld [vmem:[#allocation5] sm:$0xff]
    %v57 = vld [vmem:[#allocation5 + $0x8] sm:$0xff]
    %v58 = vld [vmem:[#allocation5 + $0x10] sm:$0xff]
    %v59 = vld [vmem:[#allocation5 + $0x18] sm:$0xff]
    %vm60 = vcmask 261120
    %v62 = vsel %vm60, %v40, 0
    %v65 = vsel %vm60, %v41, 0
    %v68 = vsel %vm60, %v42, 0
    %v71 = vsel %vm60, %v43, 0
    %v74 = vsel %vm60, %v44, 0
    %v77 = vsel %vm60, %v45, 0
    %v80 = vsel %vm60, %v46, 0
    %v83 = vsel %vm60, %v47, 0
    %v86 = vsel %vm60, %v48, 0
    %v89 = vsel %vm60, %v49, 0
    %v92 = vsel %vm60, %v50, 0
    %v95 = vsel %vm60, %v51, 0
    %v98 = vsel %vm60, %v52, 0
    %v101 = vsel %vm60, %v53, 0
    %v104 = vsel %vm60, %v54, 0
    %v107 = vsel %vm60, %v55, 0
    %109 = vmatprep.subr.mxu0 0.0
    %v110 = vand.u32 %v56, 4294901760
    %111 = vmatpush1.msra.mxu0 %v110
    %112 = vmatprep.subr.mxu0 0.0
    %v113 = vand.u32 %v57, 4294901760
    %114 = vmatpush1.msra.mxu0 %v113
    %115 = vmatprep.subr.mxu0 0.0
    %v116 = vand.u32 %v58, 4294901760
    %117 = vmatpush1.msra.mxu0 %v116
    %118 = vmatprep.subr.mxu0 0.0
    %v119 = vand.u32 %v59, 4294901760
    %120 = vmatpush1.msra.mxu0 %v119
    %121 = vmatprep.subr.mxu0 0.0
    %122 = vmatpush1.msra.mxu0 0.0
    %123 = vmatprep.subr.mxu0 0.0
    %124 = vmatpush1.msra.mxu0 0.0
    %125 = vmatprep.subr.mxu0 0.0
    %126 = vmatpush1.msra.mxu0 0.0
    %127 = vmatprep.subr.mxu0 0.0
    %128 = vmatpush1.msra.mxu0 0.0
    %129 = vmatprep.subr.mxu0 0.0
    %130 = vmatpush1.msra.mxu0 0.0
    %131 = vmatprep.subr.mxu0 0.0
    %132 = vmatpush1.msra.mxu0 0.0
    %133 = vmatprep.subr.mxu0 0.0
    %134 = vmatpush1.msra.mxu0 0.0
    %135 = vmatprep.subr.mxu0 0.0
    %136 = vmatpush1.msra.mxu0 0.0
    %137 = vmatprep.subr.mxu0 0.0
    %138 = vmatpush1.msra.mxu0 0.0
    %139 = vmatprep.subr.mxu0 0.0
    %140 = vmatpush1.msra.mxu0 0.0
    %141 = vmatprep.subr.mxu0 0.0
    %142 = vmatpush1.msra.mxu0 0.0
    %143 = vmatprep.subr.mxu0 0.0
    %144 = vmatpush1.msra.mxu0 0.0
    %145 = vmatprep.subr.mxu0 0.0
    %146 = vmatpush1.msra.mxu0 0.0
    %147 = vmatprep.subr.mxu0 0.0
    %148 = vmatpush1.msra.mxu0 0.0
    %149 = vmatprep.subr.mxu0 0.0
    %150 = vmatpush1.msra.mxu0 0.0
    %151 = vmatprep.subr.mxu0 0.0
    %152 = vmatpush1.msra.mxu0 0.0
    %153 = vmatprep.subr.mxu0 0.0
    %154 = vmatpush1.msra.mxu0 0.0
    %155 = vmatprep.subr.mxu0 0.0
    %156 = vmatpush1.msra.mxu0 0.0
    %157 = vmatprep.subr.mxu0 0.0
    %158 = vmatpush1.msra.mxu0 0.0
    %159 = vmatprep.subr.mxu0 0.0
    %160 = vmatpush1.msra.mxu0 0.0
    %161 = vmatprep.subr.mxu0 0.0
    %162 = vmatpush1.msra.mxu0 0.0
    %163 = vmatprep.subr.mxu0 0.0
    %164 = vmatpush1.msra.mxu0 0.0
    %165 = vmatprep.subr.mxu0 0.0
    %166 = vmatpush1.msra.mxu0 0.0
    %167 = vmatprep.subr.mxu0 0.0
    %168 = vmatpush1.msra.mxu0 0.0
    %169 = vmatprep.subr.mxu0 0.0
    %170 = vmatpush1.msra.mxu0 0.0
    %171 = vmatprep.subr.mxu0 0.0
    %172 = vmatpush1.msra.mxu0 0.0
    %173 = vmatprep.subr.mxu0 0.0
    %174 = vmatpush1.msra.mxu0 0.0
    %175 = vmatprep.subr.mxu0 0.0
    %176 = vmatpush1.msra.mxu0 0.0
    %177 = vmatprep.mubr.f32.mxu0 0.0
    %v178 = vand.u32 %v62, 4294901760
    %v179 = vsub.f32 %v62, %v178
    %v180 = vand.u32 %v179, 4294901760
    %v181 = vsub.f32 %v179, %v180
    %v182 = vand.u32 %v181, 4294901760
    %183 = vmatmul.mubr.f32.gmra.mrb[0].mxu0 %v182
    %v184 = vpop.f32.mrb[0].mxu0
    %v185 = vadd.f32 0.0, %v184
    %v186 = vpop.f32.mrb[0].mxu0
    %187 = vmatprep.mubr.f32.mxu0 0.0
    %v188 = vand.u32 %v65, 4294901760
    %v189 = vsub.f32 %v65, %v188
    %v190 = vand.u32 %v189, 4294901760
    %v191 = vsub.f32 %v189, %v190
    %v192 = vand.u32 %v191, 4294901760
    %193 = vmatmul.mubr.f32.gmra.mrb[0].mxu0 %v192
    %v194 = vpop.f32.mrb[0].mxu0
    %v195 = vadd.f32 0.0, %v194
    %v196 = vpop.f32.mrb[0].mxu0
    %197 = vmatprep.mubr.f32.mxu0 0.0
    %v198 = vand.u32 %v68, 4294901760
    %v199 = vsub.f32 %v68, %v198
    %v200 = vand.u32 %v199, 4294901760
    %v201 = vsub.f32 %v199, %v200
    %v202 = vand.u32 %v201, 4294901760
    %203 = vmatmul.mubr.f32.gmra.mrb[0].mxu0 %v202
    %v204 = vpop.f32.mrb[0].mxu0
    %v205 = vadd.f32 0.0, %v204
    %v206 = vpop.f32.mrb[0].mxu0
    %207 = vmatprep.mubr.f32.mxu0 0.0
    %v208 = vand.u32 %v71, 4294901760
    %v209 = vsub.f32 %v71, %v208
    %v210 = vand.u32 %v209, 4294901760
    %v211 = vsub.f32 %v209, %v210
    %v212 = vand.u32 %v211, 4294901760
    %213 = vmatmul.mubr.f32.gmra.mrb[0].mxu0 %v212
    %v214 = vpop.f32.mrb[0].mxu0
    %v215 = vadd.f32 0.0, %v214
    %v216 = vpop.f32.mrb[0].mxu0
    %217 = vmatprep.mubr.f32.mxu0 0.0
    %v218 = vand.u32 %v74, 4294901760
    %v219 = vsub.f32 %v74, %v218
    %v220 = vand.u32 %v219, 4294901760
    %v221 = vsub.f32 %v219, %v220
    %v222 = vand.u32 %v221, 4294901760
    %223 = vmatmul.mubr.f32.gmra.mrb[0].mxu0 %v222
    %v224 = vpop.f32.mrb[0].mxu0
    %v225 = vadd.f32 0.0, %v224
    %v226 = vpop.f32.mrb[0].mxu0
    %227 = vmatprep.mubr.f32.mxu0 0.0
    %v228 = vand.u32 %v77, 4294901760
    %v229 = vsub.f32 %v77, %v228
    %v230 = vand.u32 %v229, 4294901760
    %v231 = vsub.f32 %v229, %v230
    %v232 = vand.u32 %v231, 4294901760
    %233 = vmatmul.mubr.f32.gmra.mrb[0].mxu0 %v232
    %v234 = vpop.f32.mrb[0].mxu0
    %v235 = vadd.f32 0.0, %v234
    %v236 = vpop.f32.mrb[0].mxu0
    %237 = vmatprep.mubr.f32.mxu0 0.0
    %v238 = vand.u32 %v80, 4294901760
    %v239 = vsub.f32 %v80, %v238
    %v240 = vand.u32 %v239, 4294901760
    %v241 = vsub.f32 %v239, %v240
    %v242 = vand.u32 %v241, 4294901760
    %243 = vmatmul.mubr.f32.gmra.mrb[0].mxu0 %v242
    %v244 = vpop.f32.mrb[0].mxu0
    %v245 = vadd.f32 0.0, %v244
    %v246 = vpop.f32.mrb[0].mxu0
    %247 = vmatprep.mubr.f32.mxu0 0.0
    %v248 = vand.u32 %v83, 4294901760
    %v249 = vsub.f32 %v83, %v248
    %v250 = vand.u32 %v249, 4294901760
    %v251 = vsub.f32 %v249, %v250
    %v252 = vand.u32 %v251, 4294901760
    %253 = vmatmul.mubr.f32.gmra.mrb[0].mxu0 %v252
    %v254 = vpop.f32.mrb[0].mxu0
    %v255 = vadd.f32 0.0, %v254
    %v256 = vpop.f32.mrb[0].mxu0
    %257 = vmatprep.mubr.f32.mxu0 0.0
    %v258 = vand.u32 %v86, 4294901760
    %v259 = vsub.f32 %v86, %v258
    %v260 = vand.u32 %v259, 4294901760
    %v261 = vsub.f32 %v259, %v260
    %v262 = vand.u32 %v261, 4294901760
    %263 = vmatmul.mubr.f32.gmra.mrb[0].mxu0 %v262
    %v264 = vpop.f32.mrb[0].mxu0
    %v265 = vadd.f32 0.0, %v264
    %v266 = vpop.f32.mrb[0].mxu0
    %267 = vmatprep.mubr.f32.mxu0 0.0
    %v268 = vand.u32 %v89, 4294901760
    %v269 = vsub.f32 %v89, %v268
    %v270 = vand.u32 %v269, 4294901760
    %v271 = vsub.f32 %v269, %v270
    %v272 = vand.u32 %v271, 4294901760
    %273 = vmatmul.mubr.f32.gmra.mrb[0].mxu0 %v272
    %v274 = vpop.f32.mrb[0].mxu0
    %v275 = vadd.f32 0.0, %v274
    %v276 = vpop.f32.mrb[0].mxu0
    %277 = vmatprep.mubr.f32.mxu0 0.0
    %v278 = vand.u32 %v92, 4294901760
    %v279 = vsub.f32 %v92, %v278
    %v280 = vand.u32 %v279, 4294901760
    %v281 = vsub.f32 %v279, %v280
    %v282 = vand.u32 %v281, 4294901760
    %283 = vmatmul.mubr.f32.gmra.mrb[0].mxu0 %v282
    %v284 = vpop.f32.mrb[0].mxu0
    %v285 = vadd.f32 0.0, %v284
    %v286 = vpop.f32.mrb[0].mxu0
    %287 = vmatprep.mubr.f32.mxu0 0.0
    %v288 = vand.u32 %v95, 4294901760
    %v289 = vsub.f32 %v95, %v288
    %v290 = vand.u32 %v289, 4294901760
    %v291 = vsub.f32 %v289, %v290
    %v292 = vand.u32 %v291, 4294901760
    %293 = vmatmul.mubr.f32.gmra.mrb[0].mxu0 %v292
    %v294 = vpop.f32.mrb[0].mxu0
    %v295 = vadd.f32 0.0, %v294
    %v296 = vpop.f32.mrb[0].mxu0
    %297 = vmatprep.mubr.f32.mxu0 0.0
    %v298 = vand.u32 %v98, 4294901760
    %v299 = vsub.f32 %v98, %v298
    %v300 = vand.u32 %v299, 4294901760
    %v301 = vsub.f32 %v299, %v300
    %v302 = vand.u32 %v301, 4294901760
    %303 = vmatmul.mubr.f32.gmra.mrb[0].mxu0 %v302
    %v304 = vpop.f32.mrb[0].mxu0
    %v305 = vadd.f32 0.0, %v304
    %v306 = vpop.f32.mrb[0].mxu0
    %307 = vmatprep.mubr.f32.mxu0 0.0
    %v308 = vand.u32 %v101, 4294901760
    %v309 = vsub.f32 %v101, %v308
    %v310 = vand.u32 %v309, 4294901760
    %v311 = vsub.f32 %v309, %v310
    %v312 = vand.u32 %v311, 4294901760
    %313 = vmatmul.mubr.f32.gmra.mrb[0].mxu0 %v312
    %v314 = vpop.f32.mrb[0].mxu0
    %v315 = vadd.f32 0.0, %v314
    %v316 = vpop.f32.mrb[0].mxu0
    %317 = vmatprep.mubr.f32.mxu0 0.0
    %v318 = vand.u32 %v104, 4294901760
    %v319 = vsub.f32 %v104, %v318
    %v320 = vand.u32 %v319, 4294901760
    %v321 = vsub.f32 %v319, %v320
    %v322 = vand.u32 %v321, 4294901760
    %323 = vmatmul.mubr.f32.gmra.mrb[0].mxu0 %v322
    %v324 = vpop.f32.mrb[0].mxu0
    %v325 = vadd.f32 0.0, %v324
    %v326 = vpop.f32.mrb[0].mxu0
    %327 = vmatprep.mubr.f32.mxu0 0.0
    %v328 = vand.u32 %v107, 4294901760
    %v329 = vsub.f32 %v107, %v328
    %v330 = vand.u32 %v329, 4294901760
    %v331 = vsub.f32 %v329, %v330
    %v332 = vand.u32 %v331, 4294901760
    %333 = vmatmul.mubr.f32.gmra.mrb[0].mxu0 %v332
    %v334 = vpop.f32.mrb[0].mxu0
    %v335 = vadd.f32 0.0, %v334
    %v336 = vpop.f32.mrb[0].mxu0
    %337 = vdwg.mxu0
    %338 = vmatprep.subr.mxu0 0.0
    %v339 = vand.u32 %v56, 4294901760
    %v340 = vsub.f32 %v56, %v339
    %v341 = vand.u32 %v340, 4294901760
    %v342 = vsub.f32 %v340, %v341
    %v343 = vand.u32 %v342, 4294901760
    %344 = vmatpush1.msra.mxu0 %v343
    %345 = vmatprep.subr.mxu0 0.0
    %v346 = vand.u32 %v57, 4294901760
    %v347 = vsub.f32 %v57, %v346
    %v348 = vand.u32 %v347, 4294901760
    %v349 = vsub.f32 %v347, %v348
    %v350 = vand.u32 %v349, 4294901760
    %351 = vmatpush1.msra.mxu0 %v350
    %352 = vmatprep.subr.mxu0 0.0
    %v353 = vand.u32 %v58, 4294901760
    %v354 = vsub.f32 %v58, %v353
    %v355 = vand.u32 %v354, 4294901760
    %v356 = vsub.f32 %v354, %v355
    %v357 = vand.u32 %v356, 4294901760
    %358 = vmatpush1.msra.mxu0 %v357
    %359 = vmatprep.subr.mxu0 0.0
    %v360 = vand.u32 %v59, 4294901760
    %v361 = vsub.f32 %v59, %v360
    %v362 = vand.u32 %v361, 4294901760
    %v363 = vsub.f32 %v361, %v362
    %v364 = vand.u32 %v363, 4294901760
    %365 = vmatpush1.msra.mxu0 %v364
    %366 = vmatprep.subr.mxu0 0.0
    %367 = vmatpush1.msra.mxu0 0.0
    %368 = vmatprep.subr.mxu0 0.0
    %369 = vmatpush1.msra.mxu0 0.0
    %370 = vmatprep.subr.mxu0 0.0
    %371 = vmatpush1.msra.mxu0 0.0
    %372 = vmatprep.subr.mxu0 0.0
    %373 = vmatpush1.msra.mxu0 0.0
    %374 = vmatprep.subr.mxu0 0.0
    %375 = vmatpush1.msra.mxu0 0.0
    %376 = vmatprep.subr.mxu0 0.0
    %377 = vmatpush1.msra.mxu0 0.0
    %378 = vmatprep.subr.mxu0 0.0
    %379 = vmatpush1.msra.mxu0 0.0
    %380 = vmatprep.subr.mxu0 0.0
    %381 = vmatpush1.msra.mxu0 0.0
    %382 = vmatprep.subr.mxu0 0.0
    %383 = vmatpush1.msra.mxu0 0.0
    %384 = vmatprep.subr.mxu0 0.0
    %385 = vmatpush1.msra.mxu0 0.0
    %386 = vmatprep.subr.mxu0 0.0
    %387 = vmatpush1.msra.mxu0 0.0
    %388 = vmatprep.subr.mxu0 0.0
    %389 = vmatpush1.msra.mxu0 0.0
    %390 = vmatprep.subr.mxu0 0.0
    %391 = vmatpush1.msra.mxu0 0.0
    %392 = vmatprep.subr.mxu0 0.0
    %393 = vmatpush1.msra.mxu0 0.0
    %394 = vmatprep.subr.mxu0 0.0
    %395 = vmatpush1.msra.mxu0 0.0
    %396 = vmatprep.subr.mxu0 0.0
    %397 = vmatpush1.msra.mxu0 0.0
    %398 = vmatprep.subr.mxu0 0.0
    %399 = vmatpush1.msra.mxu0 0.0
    %400 = vmatprep.subr.mxu0 0.0
    %401 = vmatpush1.msra.mxu0 0.0
    %402 = vmatprep.subr.mxu0 0.0
    %403 = vmatpush1.msra.mxu0 0.0
    %404 = vmatprep.subr.mxu0 0.0
    %405 = vmatpush1.msra.mxu0 0.0
    %406 = vmatprep.subr.mxu0 0.0
    %407 = vmatpush1.msra.mxu0 0.0
    %408 = vmatprep.subr.mxu0 0.0
    %409 = vmatpush1.msra.mxu0 0.0
    %410 = vmatprep.subr.mxu0 0.0
    %411 = vmatpush1.msra.mxu0 0.0
    %412 = vmatprep.subr.mxu0 0.0
    %413 = vmatpush1.msra.mxu0 0.0
    %414 = vmatprep.subr.mxu0 0.0
    %415 = vmatpush1.msra.mxu0 0.0
    %416 = vmatprep.subr.mxu0 0.0
    %417 = vmatpush1.msra.mxu0 0.0
    %418 = vmatprep.subr.mxu0 0.0
    %419 = vmatpush1.msra.mxu0 0.0
    %420 = vmatprep.subr.mxu0 0.0
    %421 = vmatpush1.msra.mxu0 0.0
    %422 = vmatprep.mubr.f32.mxu0 0.0
    %v423 = vand.u32 %v62, 4294901760
    %424 = vmatmul.mubr.f32.gmra.mrb[0].mxu0 %v423
    %v425 = vpop.f32.mrb[0].mxu0
    %v426 = vadd.f32 %v185, %v425
    %v427 = vpop.f32.mrb[0].mxu0
    %428 = vmatprep.mubr.f32.mxu0 0.0
    %v429 = vand.u32 %v65, 4294901760
    %430 = vmatmul.mubr.f32.gmra.mrb[0].mxu0 %v429
    %v431 = vpop.f32.mrb[0].mxu0
    %v432 = vadd.f32 %v195, %v431
    %v433 = vpop.f32.mrb[0].mxu0
    %434 = vmatprep.mubr.f32.mxu0 0.0
    %v435 = vand.u32 %v68, 4294901760
    %436 = vmatmul.mubr.f32.gmra.mrb[0].mxu0 %v435
    %v437 = vpop.f32.mrb[0].mxu0
    %v438 = vadd.f32 %v205, %v437
    %v439 = vpop.f32.mrb[0].mxu0
    %440 = vmatprep.mubr.f32.mxu0 0.0
    %v441 = vand.u32 %v71, 4294901760
    %442 = vmatmul.mubr.f32.gmra.mrb[0].mxu0 %v441
    %v443 = vpop.f32.mrb[0].mxu0
    %v444 = vadd.f32 %v215, %v443
    %v445 = vpop.f32.mrb[0].mxu0
    %446 = vmatprep.mubr.f32.mxu0 0.0
    %v447 = vand.u32 %v74, 4294901760
    %448 = vmatmul.mubr.f32.gmra.mrb[0].mxu0 %v447
    %v449 = vpop.f32.mrb[0].mxu0
    %v450 = vadd.f32 %v225, %v449
    %v451 = vpop.f32.mrb[0].mxu0
    %452 = vmatprep.mubr.f32.mxu0 0.0
    %v453 = vand.u32 %v77, 4294901760
    %454 = vmatmul.mubr.f32.gmra.mrb[0].mxu0 %v453
    %v455 = vpop.f32.mrb[0].mxu0
    %v456 = vadd.f32 %v235, %v455
    %v457 = vpop.f32.mrb[0].mxu0
    %458 = vmatprep.mubr.f32.mxu0 0.0
    %v459 = vand.u32 %v80, 4294901760
    %460 = vmatmul.mubr.f32.gmra.mrb[0].mxu0 %v459
    %v461 = vpop.f32.mrb[0].mxu0
    %v462 = vadd.f32 %v245, %v461
    %v463 = vpop.f32.mrb[0].mxu0
    %464 = vmatprep.mubr.f32.mxu0 0.0
    %v465 = vand.u32 %v83, 4294901760
    %466 = vmatmul.mubr.f32.gmra.mrb[0].mxu0 %v465
    %v467 = vpop.f32.mrb[0].mxu0
    %v468 = vadd.f32 %v255, %v467
    %v469 = vpop.f32.mrb[0].mxu0
    %470 = vmatprep.mubr.f32.mxu0 0.0
    %v471 = vand.u32 %v86, 4294901760
    %472 = vmatmul.mubr.f32.gmra.mrb[0].mxu0 %v471
    %v473 = vpop.f32.mrb[0].mxu0
    %v474 = vadd.f32 %v265, %v473
    %v475 = vpop.f32.mrb[0].mxu0
    %476 = vmatprep.mubr.f32.mxu0 0.0
    %v477 = vand.u32 %v89, 4294901760
    %478 = vmatmul.mubr.f32.gmra.mrb[0].mxu0 %v477
    %v479 = vpop.f32.mrb[0].mxu0
    %v480 = vadd.f32 %v275, %v479
    %v481 = vpop.f32.mrb[0].mxu0
    %482 = vmatprep.mubr.f32.mxu0 0.0
    %v483 = vand.u32 %v92, 4294901760
    %484 = vmatmul.mubr.f32.gmra.mrb[0].mxu0 %v483
    %v485 = vpop.f32.mrb[0].mxu0
    %v486 = vadd.f32 %v285, %v485
    %v487 = vpop.f32.mrb[0].mxu0
    %488 = vmatprep.mubr.f32.mxu0 0.0
    %v489 = vand.u32 %v95, 4294901760
    %490 = vmatmul.mubr.f32.gmra.mrb[0].mxu0 %v489
    %v491 = vpop.f32.mrb[0].mxu0
    %v492 = vadd.f32 %v295, %v491
    %v493 = vpop.f32.mrb[0].mxu0
    %494 = vmatprep.mubr.f32.mxu0 0.0
    %v495 = vand.u32 %v98, 4294901760
    %496 = vmatmul.mubr.f32.gmra.mrb[0].mxu0 %v495
    %v497 = vpop.f32.mrb[0].mxu0
    %v498 = vadd.f32 %v305, %v497
    %v499 = vpop.f32.mrb[0].mxu0
    %500 = vmatprep.mubr.f32.mxu0 0.0
    %v501 = vand.u32 %v101, 4294901760
    %502 = vmatmul.mubr.f32.gmra.mrb[0].mxu0 %v501
    %v503 = vpop.f32.mrb[0].mxu0
    %v504 = vadd.f32 %v315, %v503
    %v505 = vpop.f32.mrb[0].mxu0
    %506 = vmatprep.mubr.f32.mxu0 0.0
    %v507 = vand.u32 %v104, 4294901760
    %508 = vmatmul.mubr.f32.gmra.mrb[0].mxu0 %v507
    %v509 = vpop.f32.mrb[0].mxu0
    %v510 = vadd.f32 %v325, %v509
    %v511 = vpop.f32.mrb[0].mxu0
    %512 = vmatprep.mubr.f32.mxu0 0.0
    %v513 = vand.u32 %v107, 4294901760
    %514 = vmatmul.mubr.f32.gmra.mrb[0].mxu0 %v513
    %v515 = vpop.f32.mrb[0].mxu0
    %v516 = vadd.f32 %v335, %v515
    %v517 = vpop.f32.mrb[0].mxu0
    %518 = vdwg.mxu0
    %519 = vmatprep.subr.mxu0 0.0
    %v520 = vand.u32 %v56, 4294901760
    %v521 = vsub.f32 %v56, %v520
    %522 = vmatpush1.msra.mxu0 %v521
    %523 = vmatprep.subr.mxu0 0.0
    %v524 = vand.u32 %v57, 4294901760
    %v525 = vsub.f32 %v57, %v524
    %526 = vmatpush1.msra.mxu0 %v525
    %527 = vmatprep.subr.mxu0 0.0
    %v528 = vand.u32 %v58, 4294901760
    %v529 = vsub.f32 %v58, %v528
    %530 = vmatpush1.msra.mxu0 %v529
    %531 = vmatprep.subr.mxu0 0.0
    %v532 = vand.u32 %v59, 4294901760
    %v533 = vsub.f32 %v59, %v532
    %534 = vmatpush1.msra.mxu0 %v533
    %535 = vmatprep.subr.mxu0 0.0
    %536 = vmatpush1.msra.mxu0 0.0
    %537 = vmatprep.subr.mxu0 0.0
    %538 = vmatpush1.msra.mxu0 0.0
    %539 = vmatprep.subr.mxu0 0.0
    %540 = vmatpush1.msra.mxu0 0.0
    %541 = vmatprep.subr.mxu0 0.0
    %542 = vmatpush1.msra.mxu0 0.0
    %543 = vmatprep.subr.mxu0 0.0
    %544 = vmatpush1.msra.mxu0 0.0
    %545 = vmatprep.subr.mxu0 0.0
    %546 = vmatpush1.msra.mxu0 0.0
    %547 = vmatprep.subr.mxu0 0.0
    %548 = vmatpush1.msra.mxu0 0.0
    %549 = vmatprep.subr.mxu0 0.0
    %550 = vmatpush1.msra.mxu0 0.0
    %551 = vmatprep.subr.mxu0 0.0
    %552 = vmatpush1.msra.mxu0 0.0
    %553 = vmatprep.subr.mxu0 0.0
    %554 = vmatpush1.msra.mxu0 0.0
    %555 = vmatprep.subr.mxu0 0.0
    %556 = vmatpush1.msra.mxu0 0.0
    %557 = vmatprep.subr.mxu0 0.0
    %558 = vmatpush1.msra.mxu0 0.0
    %559 = vmatprep.subr.mxu0 0.0
    %560 = vmatpush1.msra.mxu0 0.0
    %561 = vmatprep.subr.mxu0 0.0
    %562 = vmatpush1.msra.mxu0 0.0
    %563 = vmatprep.subr.mxu0 0.0
    %564 = vmatpush1.msra.mxu0 0.0
    %565 = vmatprep.subr.mxu0 0.0
    %566 = vmatpush1.msra.mxu0 0.0
    %567 = vmatprep.subr.mxu0 0.0
    %568 = vmatpush1.msra.mxu0 0.0
    %569 = vmatprep.subr.mxu0 0.0
    %570 = vmatpush1.msra.mxu0 0.0
    %571 = vmatprep.subr.mxu0 0.0
    %572 = vmatpush1.msra.mxu0 0.0
    %573 = vmatprep.subr.mxu0 0.0
    %574 = vmatpush1.msra.mxu0 0.0
    %575 = vmatprep.subr.mxu0 0.0
    %576 = vmatpush1.msra.mxu0 0.0
    %577 = vmatprep.subr.mxu0 0.0
    %578 = vmatpush1.msra.mxu0 0.0
    %579 = vmatprep.subr.mxu0 0.0
    %580 = vmatpush1.msra.mxu0 0.0
    %581 = vmatprep.subr.mxu0 0.0
    %582 = vmatpush1.msra.mxu0 0.0
    %583 = vmatprep.subr.mxu0 0.0
    %584 = vmatpush1.msra.mxu0 0.0
    %585 = vmatprep.subr.mxu0 0.0
    %586 = vmatpush1.msra.mxu0 0.0
    %587 = vmatprep.subr.mxu0 0.0
    %588 = vmatpush1.msra.mxu0 0.0
    %589 = vmatprep.subr.mxu0 0.0
    %590 = vmatpush1.msra.mxu0 0.0
    %591 = vmatprep.mubr.f32.mxu0 0.0
    %v592 = vand.u32 %v62, 4294901760
    %v593 = vsub.f32 %v62, %v592
    %594 = vmatmul.mubr.f32.gmra.mrb[0].mxu0 %v593
    %v595 = vpop.f32.mrb[0].mxu0
    %v596 = vadd.f32 %v426, %v595
    %v597 = vpop.f32.mrb[0].mxu0
    %598 = vmatprep.mubr.f32.mxu0 0.0
    %v599 = vand.u32 %v65, 4294901760
    %v600 = vsub.f32 %v65, %v599
    %601 = vmatmul.mubr.f32.gmra.mrb[0].mxu0 %v600
    %v602 = vpop.f32.mrb[0].mxu0
    %v603 = vadd.f32 %v432, %v602
    %v604 = vpop.f32.mrb[0].mxu0
    %605 = vmatprep.mubr.f32.mxu0 0.0
    %v606 = vand.u32 %v68, 4294901760
    %v607 = vsub.f32 %v68, %v606
    %608 = vmatmul.mubr.f32.gmra.mrb[0].mxu0 %v607
    %v609 = vpop.f32.mrb[0].mxu0
    %v610 = vadd.f32 %v438, %v609
    %v611 = vpop.f32.mrb[0].mxu0
    %612 = vmatprep.mubr.f32.mxu0 0.0
    %v613 = vand.u32 %v71, 4294901760
    %v614 = vsub.f32 %v71, %v613
    %615 = vmatmul.mubr.f32.gmra.mrb[0].mxu0 %v614
    %v616 = vpop.f32.mrb[0].mxu0
    %v617 = vadd.f32 %v444, %v616
    %v618 = vpop.f32.mrb[0].mxu0
    %619 = vmatprep.mubr.f32.mxu0 0.0
    %v620 = vand.u32 %v74, 4294901760
    %v621 = vsub.f32 %v74, %v620
    %622 = vmatmul.mubr.f32.gmra.mrb[0].mxu0 %v621
    %v623 = vpop.f32.mrb[0].mxu0
    %v624 = vadd.f32 %v450, %v623
    %v625 = vpop.f32.mrb[0].mxu0
    %626 = vmatprep.mubr.f32.mxu0 0.0
    %v627 = vand.u32 %v77, 4294901760
    %v628 = vsub.f32 %v77, %v627
    %629 = vmatmul.mubr.f32.gmra.mrb[0].mxu0 %v628
    %v630 = vpop.f32.mrb[0].mxu0
    %v631 = vadd.f32 %v456, %v630
    %v632 = vpop.f32.mrb[0].mxu0
    %633 = vmatprep.mubr.f32.mxu0 0.0
    %v634 = vand.u32 %v80, 4294901760
    %v635 = vsub.f32 %v80, %v634
    %636 = vmatmul.mubr.f32.gmra.mrb[0].mxu0 %v635
    %v637 = vpop.f32.mrb[0].mxu0
    %v638 = vadd.f32 %v462, %v637
    %v639 = vpop.f32.mrb[0].mxu0
    %640 = vmatprep.mubr.f32.mxu0 0.0
    %v641 = vand.u32 %v83, 4294901760
    %v642 = vsub.f32 %v83, %v641
    %643 = vmatmul.mubr.f32.gmra.mrb[0].mxu0 %v642
    %v644 = vpop.f32.mrb[0].mxu0
    %v645 = vadd.f32 %v468, %v644
    %v646 = vpop.f32.mrb[0].mxu0
    %647 = vmatprep.mubr.f32.mxu0 0.0
    %v648 = vand.u32 %v86, 4294901760
    %v649 = vsub.f32 %v86, %v648
    %650 = vmatmul.mubr.f32.gmra.mrb[0].mxu0 %v649
    %v651 = vpop.f32.mrb[0].mxu0
    %v652 = vadd.f32 %v474, %v651
    %v653 = vpop.f32.mrb[0].mxu0
    %654 = vmatprep.mubr.f32.mxu0 0.0
    %v655 = vand.u32 %v89, 4294901760
    %v656 = vsub.f32 %v89, %v655
    %657 = vmatmul.mubr.f32.gmra.mrb[0].mxu0 %v656
    %v658 = vpop.f32.mrb[0].mxu0
    %v659 = vadd.f32 %v480, %v658
    %v660 = vpop.f32.mrb[0].mxu0
    %661 = vmatprep.mubr.f32.mxu0 0.0
    %v662 = vand.u32 %v92, 4294901760
    %v663 = vsub.f32 %v92, %v662
    %664 = vmatmul.mubr.f32.gmra.mrb[0].mxu0 %v663
    %v665 = vpop.f32.mrb[0].mxu0
    %v666 = vadd.f32 %v486, %v665
    %v667 = vpop.f32.mrb[0].mxu0
    %668 = vmatprep.mubr.f32.mxu0 0.0
    %v669 = vand.u32 %v95, 4294901760
    %v670 = vsub.f32 %v95, %v669
    %671 = vmatmul.mubr.f32.gmra.mrb[0].mxu0 %v670
    %v672 = vpop.f32.mrb[0].mxu0
    %v673 = vadd.f32 %v492, %v672
    %v674 = vpop.f32.mrb[0].mxu0
    %675 = vmatprep.mubr.f32.mxu0 0.0
    %v676 = vand.u32 %v98, 4294901760
    %v677 = vsub.f32 %v98, %v676
    %678 = vmatmul.mubr.f32.gmra.mrb[0].mxu0 %v677
    %v679 = vpop.f32.mrb[0].mxu0
    %v680 = vadd.f32 %v498, %v679
    %v681 = vpop.f32.mrb[0].mxu0
    %682 = vmatprep.mubr.f32.mxu0 0.0
    %v683 = vand.u32 %v101, 4294901760
    %v684 = vsub.f32 %v101, %v683
    %685 = vmatmul.mubr.f32.gmra.mrb[0].mxu0 %v684
    %v686 = vpop.f32.mrb[0].mxu0
    %v687 = vadd.f32 %v504, %v686
    %v688 = vpop.f32.mrb[0].mxu0
    %689 = vmatprep.mubr.f32.mxu0 0.0
    %v690 = vand.u32 %v104, 4294901760
    %v691 = vsub.f32 %v104, %v690
    %692 = vmatmul.mubr.f32.gmra.mrb[0].mxu0 %v691
    %v693 = vpop.f32.mrb[0].mxu0
    %v694 = vadd.f32 %v510, %v693
    %v695 = vpop.f32.mrb[0].mxu0
    %696 = vmatprep.mubr.f32.mxu0 0.0
    %v697 = vand.u32 %v107, 4294901760
    %v698 = vsub.f32 %v107, %v697
    %699 = vmatmul.mubr.f32.gmra.mrb[0].mxu0 %v698
    %v700 = vpop.f32.mrb[0].mxu0
    %v701 = vadd.f32 %v516, %v700
    %v702 = vpop.f32.mrb[0].mxu0
    %703 = vdwg.mxu0
    %704 = vmatprep.subr.mxu0 0.0
    %v705 = vand.u32 %v56, 4294901760
    %706 = vmatpush1.msra.mxu0 %v705
    %707 = vmatprep.subr.mxu0 0.0
    %v708 = vand.u32 %v57, 4294901760
    %709 = vmatpush1.msra.mxu0 %v708
    %710 = vmatprep.subr.mxu0 0.0
    %v711 = vand.u32 %v58, 4294901760
    %712 = vmatpush1.msra.mxu0 %v711
    %713 = vmatprep.subr.mxu0 0.0
    %v714 = vand.u32 %v59, 4294901760
    %715 = vmatpush1.msra.mxu0 %v714
    %716 = vmatprep.subr.mxu0 0.0
    %717 = vmatpush1.msra.mxu0 0.0
    %718 = vmatprep.subr.mxu0 0.0
    %719 = vmatpush1.msra.mxu0 0.0
    %720 = vmatprep.subr.mxu0 0.0
    %721 = vmatpush1.msra.mxu0 0.0
    %722 = vmatprep.subr.mxu0 0.0
    %723 = vmatpush1.msra.mxu0 0.0
    %724 = vmatprep.subr.mxu0 0.0
    %725 = vmatpush1.msra.mxu0 0.0
    %726 = vmatprep.subr.mxu0 0.0
    %727 = vmatpush1.msra.mxu0 0.0
    %728 = vmatprep.subr.mxu0 0.0
    %729 = vmatpush1.msra.mxu0 0.0
    %730 = vmatprep.subr.mxu0 0.0
    %731 = vmatpush1.msra.mxu0 0.0
    %732 = vmatprep.subr.mxu0 0.0
    %733 = vmatpush1.msra.mxu0 0.0
    %734 = vmatprep.subr.mxu0 0.0
    %735 = vmatpush1.msra.mxu0 0.0
    %736 = vmatprep.subr.mxu0 0.0
    %737 = vmatpush1.msra.mxu0 0.0
    %738 = vmatprep.subr.mxu0 0.0
    %739 = vmatpush1.msra.mxu0 0.0
    %740 = vmatprep.subr.mxu0 0.0
    %741 = vmatpush1.msra.mxu0 0.0
    %742 = vmatprep.subr.mxu0 0.0
    %743 = vmatpush1.msra.mxu0 0.0
    %744 = vmatprep.subr.mxu0 0.0
    %745 = vmatpush1.msra.mxu0 0.0
    %746 = vmatprep.subr.mxu0 0.0
    %747 = vmatpush1.msra.mxu0 0.0
    %748 = vmatprep.subr.mxu0 0.0
    %749 = vmatpush1.msra.mxu0 0.0
    %750 = vmatprep.subr.mxu0 0.0
    %751 = vmatpush1.msra.mxu0 0.0
    %752 = vmatprep.subr.mxu0 0.0
    %753 = vmatpush1.msra.mxu0 0.0
    %754 = vmatprep.subr.mxu0 0.0
    %755 = vmatpush1.msra.mxu0 0.0
    %756 = vmatprep.subr.mxu0 0.0
    %757 = vmatpush1.msra.mxu0 0.0
    %758 = vmatprep.subr.mxu0 0.0
    %759 = vmatpush1.msra.mxu0 0.0
    %760 = vmatprep.subr.mxu0 0.0
    %761 = vmatpush1.msra.mxu0 0.0
    %762 = vmatprep.subr.mxu0 0.0
    %763 = vmatpush1.msra.mxu0 0.0
    %764 = vmatprep.subr.mxu0 0.0
    %765 = vmatpush1.msra.mxu0 0.0
    %766 = vmatprep.subr.mxu0 0.0
    %767 = vmatpush1.msra.mxu0 0.0
    %768 = vmatprep.subr.mxu0 0.0
    %769 = vmatpush1.msra.mxu0 0.0
    %770 = vmatprep.subr.mxu0 0.0
    %771 = vmatpush1.msra.mxu0 0.0
    %772 = vmatprep.mubr.f32.mxu0 0.0
    %v773 = vand.u32 %v62, 4294901760
    %v774 = vsub.f32 %v62, %v773
    %v775 = vand.u32 %v774, 4294901760
    %776 = vmatmul.mubr.f32.gmra.mrb[0].mxu0 %v775
    %v777 = vpop.f32.mrb[0].mxu0
    %v778 = vadd.f32 %v596, %v777
    %v779 = vpop.f32.mrb[0].mxu0
    %780 = vmatprep.mubr.f32.mxu0 0.0
    %v781 = vand.u32 %v65, 4294901760
    %v782 = vsub.f32 %v65, %v781
    %v783 = vand.u32 %v782, 4294901760
    %784 = vmatmul.mubr.f32.gmra.mrb[0].mxu0 %v783
    %v785 = vpop.f32.mrb[0].mxu0
    %v786 = vadd.f32 %v603, %v785
    %v787 = vpop.f32.mrb[0].mxu0
    %788 = vmatprep.mubr.f32.mxu0 0.0
    %v789 = vand.u32 %v68, 4294901760
    %v790 = vsub.f32 %v68, %v789
    %v791 = vand.u32 %v790, 4294901760
    %792 = vmatmul.mubr.f32.gmra.mrb[0].mxu0 %v791
    %v793 = vpop.f32.mrb[0].mxu0
    %v794 = vadd.f32 %v610, %v793
    %v795 = vpop.f32.mrb[0].mxu0
    %796 = vmatprep.mubr.f32.mxu0 0.0
    %v797 = vand.u32 %v71, 4294901760
    %v798 = vsub.f32 %v71, %v797
    %v799 = vand.u32 %v798, 4294901760
    %800 = vmatmul.mubr.f32.gmra.mrb[0].mxu0 %v799
    %v801 = vpop.f32.mrb[0].mxu0
    %v802 = vadd.f32 %v617, %v801
    %v803 = vpop.f32.mrb[0].mxu0
    %804 = vmatprep.mubr.f32.mxu0 0.0
    %v805 = vand.u32 %v74, 4294901760
    %v806 = vsub.f32 %v74, %v805
    %v807 = vand.u32 %v806, 4294901760
    %808 = vmatmul.mubr.f32.gmra.mrb[0].mxu0 %v807
    %v809 = vpop.f32.mrb[0].mxu0
    %v810 = vadd.f32 %v624, %v809
    %v811 = vpop.f32.mrb[0].mxu0
    %812 = vmatprep.mubr.f32.mxu0 0.0
    %v813 = vand.u32 %v77, 4294901760
    %v814 = vsub.f32 %v77, %v813
    %v815 = vand.u32 %v814, 4294901760
    %816 = vmatmul.mubr.f32.gmra.mrb[0].mxu0 %v815
    %v817 = vpop.f32.mrb[0].mxu0
    %v818 = vadd.f32 %v631, %v817
    %v819 = vpop.f32.mrb[0].mxu0
    %820 = vmatprep.mubr.f32.mxu0 0.0
    %v821 = vand.u32 %v80, 4294901760
    %v822 = vsub.f32 %v80, %v821
    %v823 = vand.u32 %v822, 4294901760
    %824 = vmatmul.mubr.f32.gmra.mrb[0].mxu0 %v823
    %v825 = vpop.f32.mrb[0].mxu0
    %v826 = vadd.f32 %v638, %v825
    %v827 = vpop.f32.mrb[0].mxu0
    %828 = vmatprep.mubr.f32.mxu0 0.0
    %v829 = vand.u32 %v83, 4294901760
    %v830 = vsub.f32 %v83, %v829
    %v831 = vand.u32 %v830, 4294901760
    %832 = vmatmul.mubr.f32.gmra.mrb[0].mxu0 %v831
    %v833 = vpop.f32.mrb[0].mxu0
    %v834 = vadd.f32 %v645, %v833
    %v835 = vpop.f32.mrb[0].mxu0
    %836 = vmatprep.mubr.f32.mxu0 0.0
    %v837 = vand.u32 %v86, 4294901760
    %v838 = vsub.f32 %v86, %v837
    %v839 = vand.u32 %v838, 4294901760
    %840 = vmatmul.mubr.f32.gmra.mrb[0].mxu0 %v839
    %v841 = vpop.f32.mrb[0].mxu0
    %v842 = vadd.f32 %v652, %v841
    %v843 = vpop.f32.mrb[0].mxu0
    %844 = vmatprep.mubr.f32.mxu0 0.0
    %v845 = vand.u32 %v89, 4294901760
    %v846 = vsub.f32 %v89, %v845
    %v847 = vand.u32 %v846, 4294901760
    %848 = vmatmul.mubr.f32.gmra.mrb[0].mxu0 %v847
    %v849 = vpop.f32.mrb[0].mxu0
    %v850 = vadd.f32 %v659, %v849
    %v851 = vpop.f32.mrb[0].mxu0
    %852 = vmatprep.mubr.f32.mxu0 0.0
    %v853 = vand.u32 %v92, 4294901760
    %v854 = vsub.f32 %v92, %v853
    %v855 = vand.u32 %v854, 4294901760
    %856 = vmatmul.mubr.f32.gmra.mrb[0].mxu0 %v855
    %v857 = vpop.f32.mrb[0].mxu0
    %v858 = vadd.f32 %v666, %v857
    %v859 = vpop.f32.mrb[0].mxu0
    %860 = vmatprep.mubr.f32.mxu0 0.0
    %v861 = vand.u32 %v95, 4294901760
    %v862 = vsub.f32 %v95, %v861
    %v863 = vand.u32 %v862, 4294901760
    %864 = vmatmul.mubr.f32.gmra.mrb[0].mxu0 %v863
    %v865 = vpop.f32.mrb[0].mxu0
    %v866 = vadd.f32 %v673, %v865
    %v867 = vpop.f32.mrb[0].mxu0
    %868 = vmatprep.mubr.f32.mxu0 0.0
    %v869 = vand.u32 %v98, 4294901760
    %v870 = vsub.f32 %v98, %v869
    %v871 = vand.u32 %v870, 4294901760
    %872 = vmatmul.mubr.f32.gmra.mrb[0].mxu0 %v871
    %v873 = vpop.f32.mrb[0].mxu0
    %v874 = vadd.f32 %v680, %v873
    %v875 = vpop.f32.mrb[0].mxu0
    %876 = vmatprep.mubr.f32.mxu0 0.0
    %v877 = vand.u32 %v101, 4294901760
    %v878 = vsub.f32 %v101, %v877
    %v879 = vand.u32 %v878, 4294901760
    %880 = vmatmul.mubr.f32.gmra.mrb[0].mxu0 %v879
    %v881 = vpop.f32.mrb[0].mxu0
    %v882 = vadd.f32 %v687, %v881
    %v883 = vpop.f32.mrb[0].mxu0
    %884 = vmatprep.mubr.f32.mxu0 0.0
    %v885 = vand.u32 %v104, 4294901760
    %v886 = vsub.f32 %v104, %v885
    %v887 = vand.u32 %v886, 4294901760
    %888 = vmatmul.mubr.f32.gmra.mrb[0].mxu0 %v887
    %v889 = vpop.f32.mrb[0].mxu0
    %v890 = vadd.f32 %v694, %v889
    %v891 = vpop.f32.mrb[0].mxu0
    %892 = vmatprep.mubr.f32.mxu0 0.0
    %v893 = vand.u32 %v107, 4294901760
    %v894 = vsub.f32 %v107, %v893
    %v895 = vand.u32 %v894, 4294901760
    %896 = vmatmul.mubr.f32.gmra.mrb[0].mxu0 %v895
    %v897 = vpop.f32.mrb[0].mxu0
    %v898 = vadd.f32 %v701, %v897
    %v899 = vpop.f32.mrb[0].mxu0
    %900 = vdwg.mxu0
    %901 = vmatprep.subr.mxu0 0.0
    %v902 = vand.u32 %v56, 4294901760
    %v903 = vsub.f32 %v56, %v902
    %v904 = vand.u32 %v903, 4294901760
    %905 = vmatpush1.msra.mxu0 %v904
    %906 = vmatprep.subr.mxu0 0.0
    %v907 = vand.u32 %v57, 4294901760
    %v908 = vsub.f32 %v57, %v907
    %v909 = vand.u32 %v908, 4294901760
    %910 = vmatpush1.msra.mxu0 %v909
    %911 = vmatprep.subr.mxu0 0.0
    %v912 = vand.u32 %v58, 4294901760
    %v913 = vsub.f32 %v58, %v912
    %v914 = vand.u32 %v913, 4294901760
    %915 = vmatpush1.msra.mxu0 %v914
    %916 = vmatprep.subr.mxu0 0.0
    %v917 = vand.u32 %v59, 4294901760
    %v918 = vsub.f32 %v59, %v917
    %v919 = vand.u32 %v918, 4294901760
    %920 = vmatpush1.msra.mxu0 %v919
    %921 = vmatprep.subr.mxu0 0.0
    %922 = vmatpush1.msra.mxu0 0.0
    %923 = vmatprep.subr.mxu0 0.0
    %924 = vmatpush1.msra.mxu0 0.0
    %925 = vmatprep.subr.mxu0 0.0
    %926 = vmatpush1.msra.mxu0 0.0
    %927 = vmatprep.subr.mxu0 0.0
    %928 = vmatpush1.msra.mxu0 0.0
    %929 = vmatprep.subr.mxu0 0.0
    %930 = vmatpush1.msra.mxu0 0.0
    %931 = vmatprep.subr.mxu0 0.0
    %932 = vmatpush1.msra.mxu0 0.0
    %933 = vmatprep.subr.mxu0 0.0
    %934 = vmatpush1.msra.mxu0 0.0
    %935 = vmatprep.subr.mxu0 0.0
    %936 = vmatpush1.msra.mxu0 0.0
    %937 = vmatprep.subr.mxu0 0.0
    %938 = vmatpush1.msra.mxu0 0.0
    %939 = vmatprep.subr.mxu0 0.0
    %940 = vmatpush1.msra.mxu0 0.0
    %941 = vmatprep.subr.mxu0 0.0
    %942 = vmatpush1.msra.mxu0 0.0
    %943 = vmatprep.subr.mxu0 0.0
    %944 = vmatpush1.msra.mxu0 0.0
    %945 = vmatprep.subr.mxu0 0.0
    %946 = vmatpush1.msra.mxu0 0.0
    %947 = vmatprep.subr.mxu0 0.0
    %948 = vmatpush1.msra.mxu0 0.0
    %949 = vmatprep.subr.mxu0 0.0
    %950 = vmatpush1.msra.mxu0 0.0
    %951 = vmatprep.subr.mxu0 0.0
    %952 = vmatpush1.msra.mxu0 0.0
    %953 = vmatprep.subr.mxu0 0.0
    %954 = vmatpush1.msra.mxu0 0.0
    %955 = vmatprep.subr.mxu0 0.0
    %956 = vmatpush1.msra.mxu0 0.0
    %957 = vmatprep.subr.mxu0 0.0
    %958 = vmatpush1.msra.mxu0 0.0
    %959 = vmatprep.subr.mxu0 0.0
    %960 = vmatpush1.msra.mxu0 0.0
    %961 = vmatprep.subr.mxu0 0.0
    %962 = vmatpush1.msra.mxu0 0.0
    %963 = vmatprep.subr.mxu0 0.0
    %964 = vmatpush1.msra.mxu0 0.0
    %965 = vmatprep.subr.mxu0 0.0
    %966 = vmatpush1.msra.mxu0 0.0
    %967 = vmatprep.subr.mxu0 0.0
    %968 = vmatpush1.msra.mxu0 0.0
    %969 = vmatprep.subr.mxu0 0.0
    %970 = vmatpush1.msra.mxu0 0.0
    %971 = vmatprep.subr.mxu0 0.0
    %972 = vmatpush1.msra.mxu0 0.0
    %973 = vmatprep.subr.mxu0 0.0
    %974 = vmatpush1.msra.mxu0 0.0
    %975 = vmatprep.subr.mxu0 0.0
    %976 = vmatpush1.msra.mxu0 0.0
    %977 = vmatprep.mubr.f32.mxu0 0.0
    %v978 = vand.u32 %v62, 4294901760
    %979 = vmatmul.mubr.f32.gmra.mrb[0].mxu0 %v978
    %v980 = vpop.f32.mrb[0].mxu0
    %v981 = vadd.f32 %v778, %v980
    %v982 = vpop.f32.mrb[0].mxu0
    %983 = vmatprep.mubr.f32.mxu0 0.0
    %v984 = vand.u32 %v65, 4294901760
    %985 = vmatmul.mubr.f32.gmra.mrb[0].mxu0 %v984
    %v986 = vpop.f32.mrb[0].mxu0
    %v987 = vadd.f32 %v786, %v986
    %v988 = vpop.f32.mrb[0].mxu0
    %989 = vmatprep.mubr.f32.mxu0 0.0
    %v990 = vand.u32 %v68, 4294901760
    %991 = vmatmul.mubr.f32.gmra.mrb[0].mxu0 %v990
    %v992 = vpop.f32.mrb[0].mxu0
    %v993 = vadd.f32 %v794, %v992
    %v994 = vpop.f32.mrb[0].mxu0
    %995 = vmatprep.mubr.f32.mxu0 0.0
    %v996 = vand.u32 %v71, 4294901760
    %997 = vmatmul.mubr.f32.gmra.mrb[0].mxu0 %v996
    %v998 = vpop.f32.mrb[0].mxu0
    %v999 = vadd.f32 %v802, %v998
    %v1000 = vpop.f32.mrb[0].mxu0
    %1001 = vmatprep.mubr.f32.mxu0 0.0
    %v1002 = vand.u32 %v74, 4294901760
    %1003 = vmatmul.mubr.f32.gmra.mrb[0].mxu0 %v1002
    %v1004 = vpop.f32.mrb[0].mxu0
    %v1005 = vadd.f32 %v810, %v1004
    %v1006 = vpop.f32.mrb[0].mxu0
    %1007 = vmatprep.mubr.f32.mxu0 0.0
    %v1008 = vand.u32 %v77, 4294901760
    %1009 = vmatmul.mubr.f32.gmra.mrb[0].mxu0 %v1008
    %v1010 = vpop.f32.mrb[0].mxu0
    %v1011 = vadd.f32 %v818, %v1010
    %v1012 = vpop.f32.mrb[0].mxu0
    %1013 = vmatprep.mubr.f32.mxu0 0.0
    %v1014 = vand.u32 %v80, 4294901760
    %1015 = vmatmul.mubr.f32.gmra.mrb[0].mxu0 %v1014
    %v1016 = vpop.f32.mrb[0].mxu0
    %v1017 = vadd.f32 %v826, %v1016
    %v1018 = vpop.f32.mrb[0].mxu0
    %1019 = vmatprep.mubr.f32.mxu0 0.0
    %v1020 = vand.u32 %v83, 4294901760
    %1021 = vmatmul.mubr.f32.gmra.mrb[0].mxu0 %v1020
    %v1022 = vpop.f32.mrb[0].mxu0
    %v1023 = vadd.f32 %v834, %v1022
    %v1024 = vpop.f32.mrb[0].mxu0
    %1025 = vmatprep.mubr.f32.mxu0 0.0
    %v1026 = vand.u32 %v86, 4294901760
    %1027 = vmatmul.mubr.f32.gmra.mrb[0].mxu0 %v1026
    %v1028 = vpop.f32.mrb[0].mxu0
    %v1029 = vadd.f32 %v842, %v1028
    %v1030 = vpop.f32.mrb[0].mxu0
    %1031 = vmatprep.mubr.f32.mxu0 0.0
    %v1032 = vand.u32 %v89, 4294901760
    %1033 = vmatmul.mubr.f32.gmra.mrb[0].mxu0 %v1032
    %v1034 = vpop.f32.mrb[0].mxu0
    %v1035 = vadd.f32 %v850, %v1034
    %v1036 = vpop.f32.mrb[0].mxu0
    %1037 = vmatprep.mubr.f32.mxu0 0.0
    %v1038 = vand.u32 %v92, 4294901760
    %1039 = vmatmul.mubr.f32.gmra.mrb[0].mxu0 %v1038
    %v1040 = vpop.f32.mrb[0].mxu0
    %v1041 = vadd.f32 %v858, %v1040
    %v1042 = vpop.f32.mrb[0].mxu0
    %1043 = vmatprep.mubr.f32.mxu0 0.0
    %v1044 = vand.u32 %v95, 4294901760
    %1045 = vmatmul.mubr.f32.gmra.mrb[0].mxu0 %v1044
    %v1046 = vpop.f32.mrb[0].mxu0
    %v1047 = vadd.f32 %v866, %v1046
    %v1048 = vpop.f32.mrb[0].mxu0
    %1049 = vmatprep.mubr.f32.mxu0 0.0
    %v1050 = vand.u32 %v98, 4294901760
    %1051 = vmatmul.mubr.f32.gmra.mrb[0].mxu0 %v1050
    %v1052 = vpop.f32.mrb[0].mxu0
    %v1053 = vadd.f32 %v874, %v1052
    %v1054 = vpop.f32.mrb[0].mxu0
    %1055 = vmatprep.mubr.f32.mxu0 0.0
    %v1056 = vand.u32 %v101, 4294901760
    %1057 = vmatmul.mubr.f32.gmra.mrb[0].mxu0 %v1056
    %v1058 = vpop.f32.mrb[0].mxu0
    %v1059 = vadd.f32 %v882, %v1058
    %v1060 = vpop.f32.mrb[0].mxu0
    %1061 = vmatprep.mubr.f32.mxu0 0.0
    %v1062 = vand.u32 %v104, 4294901760
    %1063 = vmatmul.mubr.f32.gmra.mrb[0].mxu0 %v1062
    %v1064 = vpop.f32.mrb[0].mxu0
    %v1065 = vadd.f32 %v890, %v1064
    %v1066 = vpop.f32.mrb[0].mxu0
    %1067 = vmatprep.mubr.f32.mxu0 0.0
    %v1068 = vand.u32 %v107, 4294901760
    %1069 = vmatmul.mubr.f32.gmra.mrb[0].mxu0 %v1068
    %v1070 = vpop.f32.mrb[0].mxu0
    %v1071 = vadd.f32 %v898, %v1070
    %v1072 = vpop.f32.mrb[0].mxu0
    %1073 = vdwg.mxu0
    %1074 = vmatprep.subr.mxu0 0.0
    %v1075 = vand.u32 %v56, 4294901760
    %1076 = vmatpush1.msra.mxu0 %v1075
    %1077 = vmatprep.subr.mxu0 0.0
    %v1078 = vand.u32 %v57, 4294901760
    %1079 = vmatpush1.msra.mxu0 %v1078
    %1080 = vmatprep.subr.mxu0 0.0
    %v1081 = vand.u32 %v58, 4294901760
    %1082 = vmatpush1.msra.mxu0 %v1081
    %1083 = vmatprep.subr.mxu0 0.0
    %v1084 = vand.u32 %v59, 4294901760
    %1085 = vmatpush1.msra.mxu0 %v1084
    %1086 = vmatprep.subr.mxu0 0.0
    %1087 = vmatpush1.msra.mxu0 0.0
    %1088 = vmatprep.subr.mxu0 0.0
    %1089 = vmatpush1.msra.mxu0 0.0
    %1090 = vmatprep.subr.mxu0 0.0
    %1091 = vmatpush1.msra.mxu0 0.0
    %1092 = vmatprep.subr.mxu0 0.0
    %1093 = vmatpush1.msra.mxu0 0.0
    %1094 = vmatprep.subr.mxu0 0.0
    %1095 = vmatpush1.msra.mxu0 0.0
    %1096 = vmatprep.subr.mxu0 0.0
    %1097 = vmatpush1.msra.mxu0 0.0
    %1098 = vmatprep.subr.mxu0 0.0
    %1099 = vmatpush1.msra.mxu0 0.0
    %1100 = vmatprep.subr.mxu0 0.0
    %1101 = vmatpush1.msra.mxu0 0.0
    %1102 = vmatprep.subr.mxu0 0.0
    %1103 = vmatpush1.msra.mxu0 0.0
    %1104 = vmatprep.subr.mxu0 0.0
    %1105 = vmatpush1.msra.mxu0 0.0
    %1106 = vmatprep.subr.mxu0 0.0
    %1107 = vmatpush1.msra.mxu0 0.0
    %1108 = vmatprep.subr.mxu0 0.0
    %1109 = vmatpush1.msra.mxu0 0.0
    %1110 = vmatprep.subr.mxu0 0.0
    %1111 = vmatpush1.msra.mxu0 0.0
    %1112 = vmatprep.subr.mxu0 0.0
    %1113 = vmatpush1.msra.mxu0 0.0
    %1114 = vmatprep.subr.mxu0 0.0
    %1115 = vmatpush1.msra.mxu0 0.0
    %1116 = vmatprep.subr.mxu0 0.0
    %1117 = vmatpush1.msra.mxu0 0.0
    %1118 = vmatprep.subr.mxu0 0.0
    %1119 = vmatpush1.msra.mxu0 0.0
    %1120 = vmatprep.subr.mxu0 0.0
    %1121 = vmatpush1.msra.mxu0 0.0
    %1122 = vmatprep.subr.mxu0 0.0
    %1123 = vmatpush1.msra.mxu0 0.0
    %1124 = vmatprep.subr.mxu0 0.0
    %1125 = vmatpush1.msra.mxu0 0.0
    %1126 = vmatprep.subr.mxu0 0.0
    %1127 = vmatpush1.msra.mxu0 0.0
    %1128 = vmatprep.subr.mxu0 0.0
    %1129 = vmatpush1.msra.mxu0 0.0
    %1130 = vmatprep.subr.mxu0 0.0
    %1131 = vmatpush1.msra.mxu0 0.0
    %1132 = vmatprep.subr.mxu0 0.0
    %1133 = vmatpush1.msra.mxu0 0.0
    %1134 = vmatprep.subr.mxu0 0.0
    %1135 = vmatpush1.msra.mxu0 0.0
    %1136 = vmatprep.subr.mxu0 0.0
    %1137 = vmatpush1.msra.mxu0 0.0
    %1138 = vmatprep.subr.mxu0 0.0
    %1139 = vmatpush1.msra.mxu0 0.0
    %1140 = vmatprep.subr.mxu0 0.0
    %1141 = vmatpush1.msra.mxu0 0.0
    %1142 = vmatprep.mubr.f32.mxu0 0.0
    %v1143 = vand.u32 %v62, 4294901760
    %1144 = vmatmul.mubr.f32.gmra.mrb[0].mxu0 %v1143
    %v1145 = vpop.f32.mrb[0].mxu0
    %v1146 = vadd.f32 %v981, %v1145
    %v1147 = vpop.f32.mrb[0].mxu0
    %1148 = vmatprep.mubr.f32.mxu0 0.0
    %v1149 = vand.u32 %v65, 4294901760
    %1150 = vmatmul.mubr.f32.gmra.mrb[0].mxu0 %v1149
    %v1151 = vpop.f32.mrb[0].mxu0
    %v1152 = vadd.f32 %v987, %v1151
    %v1153 = vpop.f32.mrb[0].mxu0
    %1154 = vmatprep.mubr.f32.mxu0 0.0
    %v1155 = vand.u32 %v68, 4294901760
    %1156 = vmatmul.mubr.f32.gmra.mrb[0].mxu0 %v1155
    %v1157 = vpop.f32.mrb[0].mxu0
    %v1158 = vadd.f32 %v993, %v1157
    %v1159 = vpop.f32.mrb[0].mxu0
    %1160 = vmatprep.mubr.f32.mxu0 0.0
    %v1161 = vand.u32 %v71, 4294901760
    %1162 = vmatmul.mubr.f32.gmra.mrb[0].mxu0 %v1161
    %v1163 = vpop.f32.mrb[0].mxu0
    %v1164 = vadd.f32 %v999, %v1163
    %v1165 = vpop.f32.mrb[0].mxu0
    %1166 = vmatprep.mubr.f32.mxu0 0.0
    %v1167 = vand.u32 %v74, 4294901760
    %1168 = vmatmul.mubr.f32.gmra.mrb[0].mxu0 %v1167
    %v1169 = vpop.f32.mrb[0].mxu0
    %v1170 = vadd.f32 %v1005, %v1169
    %v1171 = vpop.f32.mrb[0].mxu0
    %1172 = vmatprep.mubr.f32.mxu0 0.0
    %v1173 = vand.u32 %v77, 4294901760
    %1174 = vmatmul.mubr.f32.gmra.mrb[0].mxu0 %v1173
    %v1175 = vpop.f32.mrb[0].mxu0
    %v1176 = vadd.f32 %v1011, %v1175
    %v1177 = vpop.f32.mrb[0].mxu0
    %1178 = vmatprep.mubr.f32.mxu0 0.0
    %v1179 = vand.u32 %v80, 4294901760
    %1180 = vmatmul.mubr.f32.gmra.mrb[0].mxu0 %v1179
    %v1181 = vpop.f32.mrb[0].mxu0
    %v1182 = vadd.f32 %v1017, %v1181
    %v1183 = vpop.f32.mrb[0].mxu0
    %1184 = vmatprep.mubr.f32.mxu0 0.0
    %v1185 = vand.u32 %v83, 4294901760
    %1186 = vmatmul.mubr.f32.gmra.mrb[0].mxu0 %v1185
    %v1187 = vpop.f32.mrb[0].mxu0
    %v1188 = vadd.f32 %v1023, %v1187
    %v1189 = vpop.f32.mrb[0].mxu0
    %1190 = vmatprep.mubr.f32.mxu0 0.0
    %v1191 = vand.u32 %v86, 4294901760
    %1192 = vmatmul.mubr.f32.gmra.mrb[0].mxu0 %v1191
    %v1193 = vpop.f32.mrb[0].mxu0
    %v1194 = vadd.f32 %v1029, %v1193
    %v1195 = vpop.f32.mrb[0].mxu0
    %1196 = vmatprep.mubr.f32.mxu0 0.0
    %v1197 = vand.u32 %v89, 4294901760
    %1198 = vmatmul.mubr.f32.gmra.mrb[0].mxu0 %v1197
    %v1199 = vpop.f32.mrb[0].mxu0
    %v1200 = vadd.f32 %v1035, %v1199
    %v1201 = vpop.f32.mrb[0].mxu0
    %1202 = vmatprep.mubr.f32.mxu0 0.0
    %v1203 = vand.u32 %v92, 4294901760
    %1204 = vmatmul.mubr.f32.gmra.mrb[0].mxu0 %v1203
    %v1205 = vpop.f32.mrb[0].mxu0
    %v1206 = vadd.f32 %v1041, %v1205
    %v1207 = vpop.f32.mrb[0].mxu0
    %1208 = vmatprep.mubr.f32.mxu0 0.0
    %v1209 = vand.u32 %v95, 4294901760
    %1210 = vmatmul.mubr.f32.gmra.mrb[0].mxu0 %v1209
    %v1211 = vpop.f32.mrb[0].mxu0
    %v1212 = vadd.f32 %v1047, %v1211
    %v1213 = vpop.f32.mrb[0].mxu0
    %1214 = vmatprep.mubr.f32.mxu0 0.0
    %v1215 = vand.u32 %v98, 4294901760
    %1216 = vmatmul.mubr.f32.gmra.mrb[0].mxu0 %v1215
    %v1217 = vpop.f32.mrb[0].mxu0
    %v1218 = vadd.f32 %v1053, %v1217
    %v1219 = vpop.f32.mrb[0].mxu0
    %1220 = vmatprep.mubr.f32.mxu0 0.0
    %v1221 = vand.u32 %v101, 4294901760
    %1222 = vmatmul.mubr.f32.gmra.mrb[0].mxu0 %v1221
    %v1223 = vpop.f32.mrb[0].mxu0
    %v1224 = vadd.f32 %v1059, %v1223
    %v1225 = vpop.f32.mrb[0].mxu0
    %1226 = vmatprep.mubr.f32.mxu0 0.0
    %v1227 = vand.u32 %v104, 4294901760
    %1228 = vmatmul.mubr.f32.gmra.mrb[0].mxu0 %v1227
    %v1229 = vpop.f32.mrb[0].mxu0
    %v1230 = vadd.f32 %v1065, %v1229
    %v1231 = vpop.f32.mrb[0].mxu0
    %1232 = vmatprep.mubr.f32.mxu0 0.0
    %v1233 = vand.u32 %v107, 4294901760
    %1234 = vmatmul.mubr.f32.gmra.mrb[0].mxu0 %v1233
    %v1235 = vpop.f32.mrb[0].mxu0
    %v1236 = vadd.f32 %v1071, %v1235
    %v1237 = vpop.f32.mrb[0].mxu0
    %1238 = vdwg.mxu0
    %1239 = vst [vmem:[#allocation7] sm:$0xff] %v1146
    %1240 = vst [vmem:[#allocation7 + $0x8] sm:$0xff] %v1152
    %1241 = vst [vmem:[#allocation7 + $0x10] sm:$0xff] %v1158
    %1242 = vst [vmem:[#allocation7 + $0x18] sm:$0xff] %v1164
    %1243 = vst [vmem:[#allocation7 + $0x20] sm:$0xff] %v1170
    %1244 = vst [vmem:[#allocation7 + $0x28] sm:$0xff] %v1176
    %1245 = vst [vmem:[#allocation7 + $0x30] sm:$0xff] %v1182
    %1246 = vst [vmem:[#allocation7 + $0x38] sm:$0xff] %v1188
    %1247 = vst [vmem:[#allocation7 + $0x40] sm:$0xff] %v1194
    %1248 = vst [vmem:[#allocation7 + $0x48] sm:$0xff] %v1200
    %1249 = vst [vmem:[#allocation7 + $0x50] sm:$0xff] %v1206
    %1250 = vst [vmem:[#allocation7 + $0x58] sm:$0xff] %v1212
    %1251 = vst [vmem:[#allocation7 + $0x60] sm:$0xff] %v1218
    %1252 = vst [vmem:[#allocation7 + $0x68] sm:$0xff] %v1224
    %1253 = vst [vmem:[#allocation7 + $0x70] sm:$0xff] %v1230
    %1254 = vst [vmem:[#allocation7 + $0x78] sm:$0xff] %v1236
    // Predicated region
    $region18: #{tpu_custom_call.1} parent=1 // pred_check
      _
    $region19: #{tpu_custom_call.1} parent=1 // pred_check_branch
      %1256 = sbr.rel (0) target = $region21
    $region20: #{tpu_custom_call.1} parent=1 // pred_region
      %s1258 = ssub.s32 2048, 256
      %1259 = vsyncadd [#allocation4], %s1258
      %s1260 = sshll.u32 [#allocation7], 4
      %s1261 = int_to_ptr.vmem [resolvable:$true] %s1260
      %1266 = dma.vmem_to_hbm [thread:$0]  %s1261, 256, %s2, [#allocation4], 128, 128, 8
    $region21: #{tpu_custom_call.1} parent=1 // pred_fallthru
      _
    // Predicated region
    $region22: #{tpu_custom_call.1} parent=1 // pred_check
      _
    $region23: #{tpu_custom_call.1} parent=1 // pred_check_branch
      %1268 = sbr.rel (0) target = $region25
    $region24: #{tpu_custom_call.1} parent=1 // pred_region
      %1269 = dma.done [#allocation4], 2048
    $region25: #{tpu_custom_call.1} parent=1 // pred_fallthru
      _
    %1270 = vsyncpa [#allocation3], 1
    %1271 = vsyncpa [#allocation6], 1
    %1272 = vsyncpa [#allocation4], 1

</llo_original>
